<compile_context>
chip_gen: v6e
topology: v6e:2x2x1
jax: 0.10.0
libtpu: 0.0.40
codegen_flags: <defaults>
</compile_context>

<pallas_src>
import jax
import jax.numpy as jnp
from jax import lax
from jax.experimental import pallas as pl
from jax.experimental.pallas import tpu as pltpu


def positional_encoding(dim_embedding: int, max_length: int) -> jnp.ndarray:
    # Mirrors Embedding.positional_encoding (pure parameter-construction glue).
    i = jnp.arange(0, dim_embedding, 2, dtype=jnp.float32) / dim_embedding
    pos = jnp.arange(0, max_length, dtype=jnp.float32)[:, None]
    angle_freq = jnp.exp(i * -jnp.log(jnp.float32(10000.0)))
    out = jnp.zeros((max_length, dim_embedding), dtype=jnp.float32)
    out = out.at[:, 0::2].set(jnp.sin(pos * angle_freq))
    out = out.at[:, 1::2].set(jnp.cos(pos * angle_freq))
    return out


def _gather_embed_kernel(ids_ref, pos_ref, table_hbm, out_ref, rows_ref, sem):
    # ids_ref:   (N_pad,) int32, SMEM (scalar prefetch) — flattened token ids
    # pos_ref:   (T, D)  f32, VMEM — positional-encoding tile (pipelined)
    # table_hbm: (V, D)  f32, HBM  — full embedding table (memory_space=pl.ANY)
    # out_ref:   (T, D)  f32, VMEM — output tile
    # rows_ref:  (T, D)  f32, VMEM scratch — gathered rows land here
    # sem:       shared DMA semaphore for all row copies of this tile
    T, D = rows_ref.shape
    base = pl.program_id(0) * T

    # Issue all row gathers (HBM -> VMEM); they proceed concurrently.
    def _start(k, carry):
        tok = ids_ref[base + k]
        pltpu.make_async_copy(table_hbm.at[tok], rows_ref.at[k], sem).start()
        return carry

    lax.fori_loop(0, T, _start, 0)

    # Drain: every copy is the same size (D * 4 bytes), so T waits on the
    # shared semaphore complete exactly when all rows have landed.
    def _wait(k, carry):
        pltpu.make_async_copy(table_hbm.at[0], rows_ref.at[k], sem).wait()
        return carry

    lax.fori_loop(0, T, _wait, 0)

    # torch: `embedding * dim_embedding ** 1 / 2` == embedding * (D / 2)
    # (operator-precedence quirk reproduced on purpose; intended value is
    #  probably sqrt(D) — flag upstream, do not silently "fix").
    scale = jnp.float32(D) / jnp.float32(2.0)
    out_ref[...] = rows_ref[...] * scale + pos_ref[...]


def embedding_forward(ids: jnp.ndarray, table: jnp.ndarray, max_length: int,
                      *, token_tile: int = 256) -> jnp.ndarray:
    B, S = ids.shape
    V, D = table.shape
    assert S <= max_length

    N = B * S
    # Token-tile size: multiple of 8 rows (sublane-friendly), capped at token_tile.
    T = min(token_tile, ((N + 7) // 8) * 8)
    N_pad = pl.cdiv(N, T) * T

    ids_flat = ids.reshape(-1).astype(jnp.int32)
    ids_flat = jnp.pad(ids_flat, (0, N_pad - N))             # pad with valid id 0

    pos = positional_encoding(D, max_length)[:S]              # (S, D)
    pos_flat = jnp.tile(pos, (B, 1))                          # (N, D) matches flat tokens
    pos_flat = jnp.pad(pos_flat, ((0, N_pad - N), (0, 0)))

    out_flat = pl.pallas_call(
        _gather_embed_kernel,
        out_shape=jax.ShapeDtypeStruct((N_pad, D), jnp.float32),
        grid_spec=pltpu.PrefetchScalarGridSpec(
            num_scalar_prefetch=1,                            # ids -> SMEM
            grid=(N_pad // T,),
            in_specs=[
                pl.BlockSpec((T, D), lambda t, ids: (t, 0)),  # pos tile (pipelined VMEM)
                pl.BlockSpec(memory_space=pl.ANY),            # table stays in HBM
            ],
            out_specs=pl.BlockSpec((T, D), lambda t, ids: (t, 0)),
            scratch_shapes=[
                pltpu.VMEM((T, D), jnp.float32),              # gathered rows
                pltpu.SemaphoreType.DMA(()),                  # shared DMA sem
            ],
        ),
        compiler_params=pltpu.CompilerParams(
            dimension_semantics=("parallel",)),               # shards tiles across TCs (v7x)
    )(ids_flat, pos_flat, table)

    return out_flat[:N].reshape(B, S, D)


if __name__ == "__main__":
    vocab_size = 32
    dim_embedding = 128
    max_length = 16
    batch = 2
    seq = 8

    key = jax.random.PRNGKey(0)
    k_tab, k_ids = jax.random.split(key)
    # nn.Embedding default init: N(0, 1)
    table = jax.random.normal(k_tab, (vocab_size, dim_embedding), dtype=jnp.float32)
    ids = jax.random.randint(k_ids, (batch, seq), 0, vocab_size, dtype=jnp.int32)

    out = embedding_forward(ids, table, max_length)
    out = jax.block_until_ready(out)

    # Pure-JAX reference for correctness.
    ref = (jnp.take(table, ids, axis=0) * dim_embedding ** 1 / 2
           + positional_encoding(dim_embedding, max_length)[:seq])
    assert out.shape == (batch, seq, dim_embedding)
    assert jnp.allclose(out, ref, atol=1e-5, rtol=1e-5), \
        float(jnp.max(jnp.abs(out - ref)))

    print("KERNEL_OK")
</pallas_src>

<mosaic_0001>
module attributes {stable_mosaic.version = 11 : i64} {
  func.func @_gather_embed_kernel(%arg0: i32, %arg1: memref<16xi32, #tpu.memory_space<smem>>, %arg2: memref<16x128xf32, #tpu.memory_space<vmem>>, %arg3: memref<32x128xf32, #tpu.memory_space<any>>, %arg4: memref<16x128xf32, #tpu.memory_space<vmem>>, %arg5: memref<16x128xf32, #tpu.memory_space<vmem>>, %arg6: memref<!tpu.dma_semaphore, #tpu.memory_space<semaphore_mem>>) attributes {dimension_semantics = [#tpu.dimension_semantics<parallel>], iteration_bounds = array<i64: 1>, scalar_prefetch = 1 : i64, scratch_operands = 2 : i64, tpu.core_type = #tpu.core_type<tc>, window_params = [{transform_indices = @transform_0, window_bounds = array<i64: 16, 128>}, {}, {transform_indices = @transform_2, window_bounds = array<i64: 16, 128>}]} {
    %c16_i32 = arith.constant 16 : i32
    %0 = arith.muli %arg0, %c16_i32 : i32
    %c0_i32 = arith.constant 0 : i32
    %c16_i32_0 = arith.constant 16 : i32
    %1 = arith.addi %c0_i32, %c16_i32_0 : i32
    %c1_i32 = arith.constant 1 : i32
    scf.for %arg7 = %c0_i32 to %1 step %c1_i32  : i32 {
      %10 = arith.addi %0, %arg7 : i32
      %11 = arith.index_cast %10 : i32 to index
      %12 = memref.load %arg1[%11] : memref<16xi32, #tpu.memory_space<smem>>
      %c0_i32_12 = arith.constant 0 : i32
      %13 = tpu.memref_slice %arg3[%12, %c0_i32_12] : memref<32x128xf32, #tpu.memory_space<any>> -> memref<1x128xf32, #tpu.memory_space<any>>
      %14 = tpu.memref_squeeze %13 : memref<1x128xf32, #tpu.memory_space<any>> -> memref<128xf32, #tpu.memory_space<any>>
      %c0_i32_13 = arith.constant 0 : i32
      %15 = tpu.memref_slice %arg5[%arg7, %c0_i32_13] : memref<16x128xf32, #tpu.memory_space<vmem>> -> memref<1x128xf32, #tpu.memory_space<vmem>>
      %16 = tpu.memref_squeeze %15 : memref<1x128xf32, #tpu.memory_space<vmem>> -> memref<128xf32, #tpu.memory_space<vmem>>
      tpu.enqueue_dma source(%14 : memref<128xf32, #tpu.memory_space<any>>) target(%16 : memref<128xf32, #tpu.memory_space<vmem>>) target_semaphore(%arg6 : memref<!tpu.dma_semaphore, #tpu.memory_space<semaphore_mem>>)
    }
    %c16_i32_1 = arith.constant 16 : i32
    %c0_i32_2 = arith.constant 0 : i32
    %c16_i32_3 = arith.constant 16 : i32
    %2 = arith.addi %c0_i32_2, %c16_i32_3 : i32
    %c1_i32_4 = arith.constant 1 : i32
    scf.for %arg7 = %c0_i32_2 to %2 step %c1_i32_4  : i32 {
      %c0_i32_12 = arith.constant 0 : i32
      %c0_i32_13 = arith.constant 0 : i32
      %10 = tpu.memref_slice %arg3[%c0_i32_12, %c0_i32_13] : memref<32x128xf32, #tpu.memory_space<any>> -> memref<1x128xf32, #tpu.memory_space<any>>
      %11 = tpu.memref_squeeze %10 : memref<1x128xf32, #tpu.memory_space<any>> -> memref<128xf32, #tpu.memory_space<any>>
      %c0_i32_14 = arith.constant 0 : i32
      %12 = tpu.memref_slice %arg5[%arg7, %c0_i32_14] : memref<16x128xf32, #tpu.memory_space<vmem>> -> memref<1x128xf32, #tpu.memory_space<vmem>>
      %13 = tpu.memref_squeeze %12 : memref<1x128xf32, #tpu.memory_space<vmem>> -> memref<128xf32, #tpu.memory_space<vmem>>
      tpu.wait_dma2 semaphore(%arg6 : memref<!tpu.dma_semaphore, #tpu.memory_space<semaphore_mem>>) src(%11 : memref<128xf32, #tpu.memory_space<any>>) dst(%13 : memref<128xf32, #tpu.memory_space<vmem>>)
    }
    %c16_i32_5 = arith.constant 16 : i32
    %cst = arith.constant 1.280000e+02 : f32
    %cst_6 = arith.constant 2.000000e+00 : f32
    %3 = arith.divf %cst, %cst_6 : f32
    %c0 = arith.constant 0 : index
    %c0_7 = arith.constant 0 : index
    %4 = vector.load %arg5[%c0, %c0_7] : memref<16x128xf32, #tpu.memory_space<vmem>>, vector<16x128xf32>
    %5 = vector.broadcast %3 : f32 to vector<16x128xf32>
    %6 = arith.mulf %4, %5 : vector<16x128xf32>
    %c0_8 = arith.constant 0 : index
    %c0_9 = arith.constant 0 : index
    %7 = vector.load %arg2[%c0_8, %c0_9] : memref<16x128xf32, #tpu.memory_space<vmem>>, vector<16x128xf32>
    %8 = arith.addf %6, %7 : vector<16x128xf32>
    %c0_10 = arith.constant 0 : index
    %c0_11 = arith.constant 0 : index
    %9 = vector.load %arg4[%c0_10, %c0_11] : memref<16x128xf32, #tpu.memory_space<vmem>>, vector<16x128xf32>
    tpu.vector_store %arg4[%c0_10, %c0_11], %8 {strides = array<i32>} : memref<16x128xf32, #tpu.memory_space<vmem>>, vector<16x128xf32>,
    return
  }
  func.func @transform_0(%arg0: i32, %arg1: memref<16xi32, #tpu.memory_space<smem>>) -> (i32, i32) {
    %c0_i32 = arith.constant 0 : i32
    %c0_i32_0 = arith.constant 0 : i32
    return %arg0, %c0_i32 : i32, i32
  }
  func.func @transform_2(%arg0: i32, %arg1: memref<16xi32, #tpu.memory_space<smem>>) -> (i32, i32) {
    %c0_i32 = arith.constant 0 : i32
    %c0_i32_0 = arith.constant 0 : i32
    return %arg0, %c0_i32 : i32, i32
  }
}

</mosaic_0001>

<llo_original>
// kernel: tpu_custom_call.1
$region0: #{tpu_custom_call.1}
  #allocation0 [shape = 'u32[]', space=smem, size = 0x4, offset = 0x4, fixed_abs, tag = 'smem constant byte address 0x4 - core index']
  #allocation1 [shape = 'u32[144,128]{1,0:T(1,128)}', space=vmem, size = 0x12000, scoped, tag = 'internal scratch']
  #allocation2 [shape = 'f32[16,128]{1,0:T(8,128)}', space=vmem, size = 0x2000, scoped, tag = 'scratch operand']
  #allocation3 [shape = 's32[1]{0}', space=sflag, size = 0x4, scoped, tag = 'scratch operand']
  #allocation4 [shape = 's32[1]{0}', space=sflag, size = 0x4, scoped, tag = 'scoped memory for tpu_custom_call.1']
  #allocation5 [shape = 'u8[512]{0}', space=smem, size = 0x200, scoped, tag = 'prefetched SMEM operand 0']
  #allocation10 [shape = 's32[]', space=sflag, size = 0x4, offset = 0, fixed_abs, tag = 'sflag constant byte address 0x0 - dummy sync flag']
  #allocation11 [shape = 's32[]', space=sflag, size = 0x4, offset = 0, fixed_abs, tag = 'sflag constant byte address 0x0 - dummy sync flag']
  #allocation12 [shape = 'u32[]', space=smem, size = 0x4, offset = 0x44, fixed_abs, tag = 'smem constant byte address 0x44 - assertion arg 0']
  #allocation13 [shape = 'u32[]', space=smem, size = 0x4, offset = 0x48, fixed_abs, tag = 'smem constant byte address 0x48 - assertion arg 1']
  %s0 = inlined_call_operand.hbm [shape: s32[16], index: 0, kind: input, shape index: {}]
  %s1 = inlined_call_operand.hbm [shape: f32[16,128], index: 1, kind: input, shape index: {}]
  %s2 = inlined_call_operand.hbm [shape: f32[32,128], index: 2, kind: input, shape index: {}]
  %s3 = inlined_call_operand.hbm [shape: f32[16,128], index: 3, kind: output, shape index: {}]
  %s4 = sld [smem:[#allocation0]]
  $region36: #{tpu_custom_call.1} parent=0
    _
  %s6 = ssub.s32 1, %s4
  %s7 = scalar_select 0, %s6, %s4
  %9 = dma.hbm_to_smem %s0, 16, [#allocation5], [#allocation4]
  %10 = dma.done [#allocation4], 16
  %11 = sfence
  $region1: #{tpu_custom_call.1} parent=0
    #allocation6 [shape = 'u8[8192]{0}', space=vmem, size = 0x2000, scoped, tag = 'input window, operand 1, single buffered']
    #allocation7 [shape = 's32[1]{0}', space=sflag, size = 0x4, scoped, tag = 'scoped memory for tpu_custom_call.1']
    #allocation8 [shape = 's32[1]{0}', space=sflag, size = 0x4, scoped, tag = 'scoped memory for tpu_custom_call.1']
    #allocation9 [shape = 'u8[8192]{0}', space=vmem, size = 0x2000, scoped, tag = 'output window, operand 0, single buffered']
    %12 = vsyncpa [#allocation7], 0
    %13 = vsyncpa [#allocation8], 0
    // Predicated region
    $region2: #{tpu_custom_call.1} parent=1 // pred_check
      _
    $region3: #{tpu_custom_call.1} parent=1 // pred_check_branch
      %15 = sbr.rel (0) target = $region5
    $region4: #{tpu_custom_call.1} parent=1 // pred_region
      %s17 = ssub.s32 256, 256
      %18 = vsyncadd [#allocation7], %s17
      %s19 = sshll.u32 [#allocation6], 4
      %s20 = int_to_ptr.vmem [resolvable:$true] %s19
      %25 = dma.hbm_to_vmem [thread:$0]  %s1, 256, %s20, [#allocation7], 128, 128, 8
    $region5: #{tpu_custom_call.1} parent=1 // pred_fallthru
      _
    // Predicated region
    $region6: #{tpu_custom_call.1} parent=1 // pred_check
      _
    $region7: #{tpu_custom_call.1} parent=1 // pred_check_branch
      %27 = sbr.rel (0) target = $region9
    $region8: #{tpu_custom_call.1} parent=1 // pred_region
      %28 = dma.done [#allocation7], 256
    $region9: #{tpu_custom_call.1} parent=1 // pred_fallthru
      _
    %s29 = smul.u32 0, 16
    loop: start=0, step=1, limit=16
    $region10: #{tpu_custom_call.1} parent=1 // loop_pre_header
      _
    $region11: #{tpu_custom_call.1} parent=1 // loop_header
      %s31 = sphi 0, %s35
      %p32 = scmp.ge.s32.totalorder %s31, 16
    $region12: #{tpu_custom_call.1} parent=1 // loop_header_branch
      %34 = sbr.rel (%p32) target = $region16
    $region13: #{tpu_custom_call.1} parent=1 // loop_body
      %s36 = sadd.s32 %s29, %s31
      %s37 = sld [smem:[#allocation5 + %s36]]
      %s38 = smul.addr %s37, 16
      %s39 = scalar_lea.hbm %s2, %s38
      %s40 = scalar_lea.vmem [#allocation2], %s31
      // Predicated region
      $region17: #{tpu_custom_call.1} parent=13 // pred_check
        _
      $region18: #{tpu_custom_call.1} parent=13 // pred_check_branch
        %42 = sbr.rel target = $region20
      $region19: #{tpu_custom_call.1} parent=13 // pred_region
        %43 = sst [smem:[#allocation12]] [#allocation11]
        %44 = sst [smem:[#allocation13]] [#allocation10]
      $region20: #{tpu_custom_call.1} parent=13 // pred_fallthru
        _
      %46 = shalt.err (0)
      %s48 = sshll.u32 %s40, 4
      %s49 = int_to_ptr.vmem [resolvable:$true] %s48
      %51 = dma.hbm_to_vmem [thread:$0]  %s39, 16, %s49, [#allocation3]
    $region14: #{tpu_custom_call.1} parent=1 // loop_footer
      %s35 = sadd.s32 1, %s31
    $region15: #{tpu_custom_call.1} parent=1 // loop_footer_branch
      %30 = sbr.rel target = $region11
    $region16: #{tpu_custom_call.1} parent=1 // loop_exit
      _
    loop: start=0, step=1, limit=16
    $region21: #{tpu_custom_call.1} parent=1 // loop_pre_header
      _
    $region22: #{tpu_custom_call.1} parent=1 // loop_header
      %s53 = sphi 0, %s57
      %p54 = scmp.ge.s32.totalorder %s53, 16
    $region23: #{tpu_custom_call.1} parent=1 // loop_header_branch
      %56 = sbr.rel (%p54) target = $region27
    $region24: #{tpu_custom_call.1} parent=1 // loop_body
      %59 = dma.done [#allocation3], 16
    $region25: #{tpu_custom_call.1} parent=1 // loop_footer
      %s57 = sadd.s32 1, %s53
    $region26: #{tpu_custom_call.1} parent=1 // loop_footer_branch
      %52 = sbr.rel target = $region22
    $region27: #{tpu_custom_call.1} parent=1 // loop_exit
      _
    %v60 = vld [vmem:[#allocation2] sm:$0xff]
    %v61 = vld [vmem:[#allocation2 + $0x8] sm:$0xff]
    %v62 = vmul.f32 %v60, 64.0
    %v63 = vmul.f32 %v61, 64.0
    %v64 = vld [vmem:[#allocation6] sm:$0xff]
    %v65 = vld [vmem:[#allocation6 + $0x8] sm:$0xff]
    %v66 = vadd.f32 %v62, %v64
    %v67 = vadd.f32 %v63, %v65
    %68 = vst [vmem:[#allocation9] sm:$0xff] %v66
    %69 = vst [vmem:[#allocation9 + $0x8] sm:$0xff] %v67
    // Predicated region
    $region28: #{tpu_custom_call.1} parent=1 // pred_check
      _
    $region29: #{tpu_custom_call.1} parent=1 // pred_check_branch
      %71 = sbr.rel (0) target = $region31
    $region30: #{tpu_custom_call.1} parent=1 // pred_region
      %s73 = ssub.s32 256, 256
      %74 = vsyncadd [#allocation8], %s73
      %s75 = sshll.u32 [#allocation9], 4
      %s76 = int_to_ptr.vmem [resolvable:$true] %s75
      %81 = dma.vmem_to_hbm [thread:$0]  %s76, 256, %s3, [#allocation8], 128, 128, 8
    $region31: #{tpu_custom_call.1} parent=1 // pred_fallthru
      _
    // Predicated region
    $region32: #{tpu_custom_call.1} parent=1 // pred_check
      _
    $region33: #{tpu_custom_call.1} parent=1 // pred_check_branch
      %83 = sbr.rel (0) target = $region35
    $region34: #{tpu_custom_call.1} parent=1 // pred_region
      %84 = dma.done [#allocation8], 256
    $region35: #{tpu_custom_call.1} parent=1 // pred_fallthru
      _
    %85 = vsyncpa [#allocation7], 1
    %86 = vsyncpa [#allocation8], 1
  %87 = vsyncmov [#allocation3]
  %s88 = vpop.sfrf %87
  %p89 = scmp.eq.s32.totalorder %s88, 0
  %p90 = pneg %p89
  %92 = shalt.err (%p90)

</llo_original>
